<compile_context>
chip_gen: v6e
topology: v6e:2x2x1
jax: 0.10.0
libtpu: 0.0.40
codegen_flags: <defaults>
</compile_context>

<pallas_src>
import jax
import jax.numpy as jnp
import numpy as np
from jax.experimental import pallas as pl
from jax.experimental.pallas import tpu as pltpu


def _graph_encoder_kernel(idx_ref,   # (3, TB) int32: rows = head, rel+Ne, tail
                          tab_ref,   # (2*D, Nt) bf16: [0:D)=hi, [D:2D)=lo split
                          out_ref):  # (1, TB) f32
    two_d, nt = tab_ref.shape
    d = two_d // 2

    idx = idx_ref[...]                       # (3, TB)
    h_idx = idx[0:1, :]                      # (1, TB)
    r_idx = idx[1:2, :]
    t_idx = idx[2:3, :]

    # Combined selector (Nt, TB) with values in {-1, 0, +1}: +1 at the head
    # row, +1 at the (offset) relation row, -1 at the tail row.  Only a
    # (Nt, 1) column iota is materialized; the compares broadcast it.
    # NOTE: out-of-range indices silently select nothing (zero row) instead of
    # erroring like nn.Embedding.
    row_ids = jax.lax.broadcasted_iota(jnp.int32, (nt, 1), 0)
    sel = ((row_ids == h_idx).astype(jnp.float32)
           + (row_ids == r_idx).astype(jnp.float32)
           - (row_ids == t_idx).astype(jnp.float32)).astype(jnp.bfloat16)

    # Single fused gather matmul on the MXU.  Values of `sel` are exact in
    # bf16, and the hi/lo bf16 split of the f32 table recovers full f32
    # accuracy with plain-bf16 MXU passes (cheaper than HIGH/HIGHEST).
    s2 = jnp.dot(tab_ref[...], sel,
                 preferred_element_type=jnp.float32)          # (2D, TB)
    s = s2[:d, :] + s2[d:, :]                                 # (D, TB) ~ f32 exact

    # L1 norm over the embedding dim (sublane reduce) -> lane-dense row.
    out_ref[...] = jnp.sum(jnp.abs(s), axis=0, keepdims=True)


def _round_up(x, m):
    return ((x + m - 1) // m) * m


def _vmem_capacity_bytes():
    try:
        return int(pltpu.get_tpu_info().vmem_capacity_bytes)
    except Exception:
        return 64 * 1024 * 1024   # conservative default: v7x per-TensorCore VMEM


def _split_hi_lo_bf16(x_f32):
    hi = x_f32.astype(jnp.bfloat16)
    lo = (x_f32 - hi.astype(jnp.float32)).astype(jnp.bfloat16)
    return hi, lo


def graph_encoder_forward(entity_emb, relation_emb,
                          head_indices, relation_indices, tail_indices,
                          *, block_size=None):
    """Pallas equivalent of GraphEncoder.forward.

    entity_emb:   [num_entities, D] float32
    relation_emb: [num_relations, D] float32
    *_indices:    [B] int32
    returns:      [B] float32  (L1 norm of head + rel - tail embeddings)
    """
    B = int(head_indices.shape[0])
    Ne, D = entity_emb.shape
    Nr, Dr = relation_emb.shape
    assert D == Dr
    Nt = Ne + Nr

    vmem_cap = _vmem_capacity_bytes()

    # Fused, transposed table (D, Ne+Nr), then bf16 hi/lo split stacked on the
    # embedding axis -> (2D, Nt) bf16 (same bytes as one f32 table).
    tab = jnp.concatenate([jnp.asarray(entity_emb, jnp.float32).T,
                           jnp.asarray(relation_emb, jnp.float32).T], axis=1)
    hi, lo = _split_hi_lo_bf16(tab)
    tab_stacked = jnp.concatenate([hi, lo], axis=0)           # (2D, Nt) bf16
    table_bytes = int(tab_stacked.size) * 2

    def step_bytes(tb):
        io = 2 * (3 * tb * 4) + 2 * (tb * 4)                  # double-buffered idx/out
        work = 4 * Nt * tb * 4 + 4 * D * tb * 4               # selector + matmul temps
        return io + work

    if block_size is None:
        TB = min(512, max(128, _round_up(B, 128)))            # amortize step overhead
    else:
        TB = int(block_size)
    assert TB % 128 == 0, "block_size must be a multiple of 128"

    budget = int(0.75 * vmem_cap)                             # headroom for the compiler
    while TB > 128 and table_bytes + step_bytes(TB) > budget:
        TB //= 2
    if table_bytes + step_bytes(TB) > budget:
        # TODO(synk): for vocabularies whose tables do not fit in VMEM, switch
        # to an HBM-resident table (memory_space=pl.ANY) with scalar-prefetched
        # indices and a double-buffered per-row DMA gather instead of the
        # one-hot MXU gather (which scales as O(Ne*D*TB)).
        raise NotImplementedError(
            "embedding tables too large for the VMEM-resident kernel")

    num_blocks = -(-B // TB)
    Bp = num_blocks * TB

    def prep(ix, offset):
        ix = jnp.asarray(ix, jnp.int32).reshape(B)
        if Bp != B:
            ix = jnp.pad(ix, (0, Bp - B))      # padded triples hit valid row 0
        return (ix + offset).reshape(num_blocks, 1, TB)

    # One packed index block per step: rows = (head, relation+Ne, tail).
    idx3 = jnp.concatenate([prep(head_indices, 0),
                            prep(relation_indices, Ne),
                            prep(tail_indices, 0)], axis=1)   # (nb, 3, TB) int32

    vmem_limit = int(min(vmem_cap,
                         max(8 * 1024 * 1024,
                             2 * (table_bytes + step_bytes(TB)))))

    def call(table_spec):
        grid_spec = pltpu.PrefetchScalarGridSpec(
            num_scalar_prefetch=0,
            grid=(num_blocks,),
            in_specs=[
                # packed indices: leading grid dim squeezed, (3, TB) in-kernel
                pl.BlockSpec((None, 3, TB), lambda i: (i, 0, 0)),
                table_spec,                                   # resident table
            ],
            out_specs=pl.BlockSpec((None, 1, TB), lambda i: (i, 0, 0)),
        )
        return pl.pallas_call(
            _graph_encoder_kernel,
            grid_spec=grid_spec,
            out_shape=jax.ShapeDtypeStruct((num_blocks, 1, TB), jnp.float32),
            compiler_params=pltpu.CompilerParams(
                dimension_semantics=("parallel",),
                vmem_limit_bytes=vmem_limit),
        )(idx3, tab_stacked)

    # The table never changes across grid steps; a single VMEM buffer halves
    # its resident footprint (biggest VMEM lever on v7x's 64 MiB/TC).  Fall
    # back to the default double-buffered spec on jax versions without
    # pipeline_mode support.
    try:
        out = call(pl.BlockSpec((2 * D, Nt), lambda i: (0, 0),
                                pipeline_mode=pl.Buffered(1)))
    except Exception:
        out = call(pl.BlockSpec((2 * D, Nt), lambda i: (0, 0)))

    return out.reshape(Bp)[:B]


if __name__ == "__main__":
    num_entities = 32
    num_relations = 8
    embedding_dim = 128
    batch = 8

    key = jax.random.PRNGKey(0)
    k_ent, k_rel, k_h, k_r, k_t = jax.random.split(key, 5)

    # nn.Embedding default init ~ N(0, 1)
    entity_emb = jax.random.normal(k_ent, (num_entities, embedding_dim),
                                   dtype=jnp.float32)
    relation_emb = jax.random.normal(k_rel, (num_relations, embedding_dim),
                                     dtype=jnp.float32)

    head_idx = jax.random.randint(k_h, (batch,), 0, num_entities, dtype=jnp.int32)
    rel_idx = jax.random.randint(k_r, (batch,), 0, num_relations, dtype=jnp.int32)
    tail_idx = jax.random.randint(k_t, (batch,), 0, num_entities, dtype=jnp.int32)

    score = graph_encoder_forward(entity_emb, relation_emb,
                                  head_idx, rel_idx, tail_idx)
    score = jax.block_until_ready(score)

    # Reference (plain JAX) check of the same math.
    ref = jnp.sum(jnp.abs(entity_emb[head_idx]
                          + relation_emb[rel_idx]
                          - entity_emb[tail_idx]), axis=1)
    assert score.shape == (batch,)
    np.testing.assert_allclose(np.asarray(score), np.asarray(ref),
                               rtol=1e-3, atol=1e-3)

    print("KERNEL_OK")
</pallas_src>

<mosaic_0001>
module attributes {stable_mosaic.version = 11 : i64} {
  func.func @_graph_encoder_kernel(%arg0: i32, %arg1: memref<1x3x128xi32, #tpu.memory_space<vmem>>, %arg2: memref<256x40xbf16, #tpu.memory_space<vmem>>, %arg3: memref<1x1x128xf32, #tpu.memory_space<vmem>>) attributes {dimension_semantics = [#tpu.dimension_semantics<parallel>], iteration_bounds = array<i64: 1>, scalar_prefetch = 0 : i64, scratch_operands = 0 : i64, tpu.core_type = #tpu.core_type<tc>, window_params = [{transform_indices = @transform_0, window_bounds = array<i64: 1, 3, 128>}, {pipeline_mode = #tpu.pipeline_mode<synchronous>, transform_indices = @transform_1, window_bounds = array<i64: 256, 40>}, {transform_indices = @transform_2, window_bounds = array<i64: 1, 1, 128>}]} {
    %c0 = arith.constant 0 : index
    %c0_0 = arith.constant 0 : index
    %c0_1 = arith.constant 0 : index
    %0 = vector.load %arg1[%c0, %c0_0, %c0_1] : memref<1x3x128xi32, #tpu.memory_space<vmem>>, vector<1x3x128xi32>
    %1 = vector.shape_cast %0 : vector<1x3x128xi32> to vector<3x128xi32>
    %2 = vector.extract_strided_slice %1 {offsets = [0, 0], sizes = [1, 128], strides = [1, 1]} : vector<3x128xi32> to vector<1x128xi32>
    %3 = vector.extract_strided_slice %1 {offsets = [1, 0], sizes = [1, 128], strides = [1, 1]} : vector<3x128xi32> to vector<1x128xi32>
    %4 = vector.extract_strided_slice %1 {offsets = [2, 0], sizes = [1, 128], strides = [1, 1]} : vector<3x128xi32> to vector<1x128xi32>
    %5 = tpu.iota {dimensions = array<i32: 0>} : vector<40x1xi32>
    %6 = vector.broadcast %5 : vector<40x1xi32> to vector<40x128xi32>
    %7 = vector.broadcast %2 : vector<1x128xi32> to vector<40x128xi32>
    %8 = arith.cmpi eq, %6, %7 : vector<40x128xi32>
    %9 = arith.extui %8 : vector<40x128xi1> to vector<40x128xi32>
    %10 = arith.sitofp %9 : vector<40x128xi32> to vector<40x128xf32>
    %11 = vector.broadcast %5 : vector<40x1xi32> to vector<40x128xi32>
    %12 = vector.broadcast %3 : vector<1x128xi32> to vector<40x128xi32>
    %13 = arith.cmpi eq, %11, %12 : vector<40x128xi32>
    %14 = arith.extui %13 : vector<40x128xi1> to vector<40x128xi32>
    %15 = arith.sitofp %14 : vector<40x128xi32> to vector<40x128xf32>
    %16 = arith.addf %10, %15 : vector<40x128xf32>
    %17 = vector.broadcast %5 : vector<40x1xi32> to vector<40x128xi32>
    %18 = vector.broadcast %4 : vector<1x128xi32> to vector<40x128xi32>
    %19 = arith.cmpi eq, %17, %18 : vector<40x128xi32>
    %20 = arith.extui %19 : vector<40x128xi1> to vector<40x128xi32>
    %21 = arith.sitofp %20 : vector<40x128xi32> to vector<40x128xf32>
    %22 = arith.subf %16, %21 : vector<40x128xf32>
    %23 = arith.truncf %22 : vector<40x128xf32> to vector<40x128xbf16>
    %c0_2 = arith.constant 0 : index
    %c0_3 = arith.constant 0 : index
    %24 = vector.load %arg2[%c0_2, %c0_3] : memref<256x40xbf16, #tpu.memory_space<vmem>>, vector<256x40xbf16>
    %cst = arith.constant dense<0.000000e+00> : vector<256x128xf32>
    %25 = tpu.matmul %24, %23, %cst {dimension_numbers = #tpu.dot_dimension_numbers<[1], [0], [0], [1], [0, 0, 1, 1], [], []>} : vector<256x40xbf16>, vector<40x128xbf16>, vector<256x128xf32> -> vector<256x128xf32>
    %26 = vector.extract_strided_slice %25 {offsets = [0, 0], sizes = [128, 128], strides = [1, 1]} : vector<256x128xf32> to vector<128x128xf32>
    %27 = vector.extract_strided_slice %25 {offsets = [128, 0], sizes = [128, 128], strides = [1, 1]} : vector<256x128xf32> to vector<128x128xf32>
    %28 = arith.addf %26, %27 : vector<128x128xf32>
    %29 = math.absf %28 : vector<128x128xf32>
    %cst_4 = arith.constant dense<0.000000e+00> : vector<128xf32>
    %30 = vector.multi_reduction <add>, %29, %cst_4 [0] : vector<128x128xf32> to vector<128xf32>
    %31 = vector.shape_cast %30 : vector<128xf32> to vector<1x128xf32>
    %c0_5 = arith.constant 0 : index
    %c0_6 = arith.constant 0 : index
    %c0_7 = arith.constant 0 : index
    %32 = vector.load %arg3[%c0_5, %c0_6, %c0_7] : memref<1x1x128xf32, #tpu.memory_space<vmem>>, vector<1x1x128xf32>
    %33 = vector.shape_cast %32 : vector<1x1x128xf32> to vector<1x128xf32>
    %34 = vector.shape_cast %31 : vector<1x128xf32> to vector<1x1x128xf32>
    tpu.vector_store %arg3[%c0_5, %c0_6, %c0_7], %34 {strides = array<i32>} : memref<1x1x128xf32, #tpu.memory_space<vmem>>, vector<1x1x128xf32>,
    return
  }
  func.func @transform_0(%arg0: i32) -> (i32, i32, i32) {
    %c0_i32 = arith.constant 0 : i32
    %c0_i32_0 = arith.constant 0 : i32
    %c0_i32_1 = arith.constant 0 : i32
    return %arg0, %c0_i32, %c0_i32_0 : i32, i32, i32
  }
  func.func @transform_1(%arg0: i32) -> (i32, i32) {
    %c0_i32 = arith.constant 0 : i32
    %c0_i32_0 = arith.constant 0 : i32
    %c0_i32_1 = arith.constant 0 : i32
    return %c0_i32, %c0_i32_0 : i32, i32
  }
  func.func @transform_2(%arg0: i32) -> (i32, i32, i32) {
    %c0_i32 = arith.constant 0 : i32
    %c0_i32_0 = arith.constant 0 : i32
    %c0_i32_1 = arith.constant 0 : i32
    return %arg0, %c0_i32, %c0_i32_0 : i32, i32, i32
  }
}

module attributes {stable_mosaic.version = 11 : i64} {
  func.func @_graph_encoder_kernel(%arg0: i32, %arg1: memref<1x3x128xi32, #tpu.memory_space<vmem>>, %arg2: memref<256x40xbf16, #tpu.memory_space<vmem>>, %arg3: memref<1x1x128xf32, #tpu.memory_space<vmem>>) attributes {dimension_semantics = [#tpu.dimension_semantics<parallel>], iteration_bounds = array<i64: 1>, scalar_prefetch = 0 : i64, scratch_operands = 0 : i64, tpu.core_type = #tpu.core_type<tc>, window_params = [{transform_indices = @transform_0, window_bounds = array<i64: 1, 3, 128>}, {pipeline_mode = #tpu.pipeline_mode<synchronous>, transform_indices = @transform_1, window_bounds = array<i64: 256, 40>}, {transform_indices = @transform_2, window_bounds = array<i64: 1, 1, 128>}]} {
    %c0 = arith.constant 0 : index
    %c0_0 = arith.constant 0 : index
    %c0_1 = arith.constant 0 : index
    %0 = vector.load %arg1[%c0, %c0_0, %c0_1] : memref<1x3x128xi32, #tpu.memory_space<vmem>>, vector<1x3x128xi32>
    %1 = vector.shape_cast %0 : vector<1x3x128xi32> to vector<3x128xi32>
    %2 = vector.extract_strided_slice %1 {offsets = [0, 0], sizes = [1, 128], strides = [1, 1]} : vector<3x128xi32> to vector<1x128xi32>
    %3 = vector.extract_strided_slice %1 {offsets = [1, 0], sizes = [1, 128], strides = [1, 1]} : vector<3x128xi32> to vector<1x128xi32>
    %4 = vector.extract_strided_slice %1 {offsets = [2, 0], sizes = [1, 128], strides = [1, 1]} : vector<3x128xi32> to vector<1x128xi32>
    %5 = tpu.iota {dimensions = array<i32: 0>} : vector<40x1xi32>
    %6 = vector.broadcast %5 : vector<40x1xi32> to vector<40x128xi32>
    %7 = vector.broadcast %2 : vector<1x128xi32> to vector<40x128xi32>
    %8 = arith.cmpi eq, %6, %7 : vector<40x128xi32>
    %9 = arith.extui %8 : vector<40x128xi1> to vector<40x128xi32>
    %10 = arith.sitofp %9 : vector<40x128xi32> to vector<40x128xf32>
    %11 = vector.broadcast %5 : vector<40x1xi32> to vector<40x128xi32>
    %12 = vector.broadcast %3 : vector<1x128xi32> to vector<40x128xi32>
    %13 = arith.cmpi eq, %11, %12 : vector<40x128xi32>
    %14 = arith.extui %13 : vector<40x128xi1> to vector<40x128xi32>
    %15 = arith.sitofp %14 : vector<40x128xi32> to vector<40x128xf32>
    %16 = arith.addf %10, %15 : vector<40x128xf32>
    %17 = vector.broadcast %5 : vector<40x1xi32> to vector<40x128xi32>
    %18 = vector.broadcast %4 : vector<1x128xi32> to vector<40x128xi32>
    %19 = arith.cmpi eq, %17, %18 : vector<40x128xi32>
    %20 = arith.extui %19 : vector<40x128xi1> to vector<40x128xi32>
    %21 = arith.sitofp %20 : vector<40x128xi32> to vector<40x128xf32>
    %22 = arith.subf %16, %21 : vector<40x128xf32>
    %23 = arith.truncf %22 : vector<40x128xf32> to vector<40x128xbf16>
    %c0_2 = arith.constant 0 : index
    %c0_3 = arith.constant 0 : index
    %24 = vector.load %arg2[%c0_2, %c0_3] : memref<256x40xbf16, #tpu.memory_space<vmem>>, vector<256x40xbf16>
    %cst = arith.constant dense<0.000000e+00> : vector<256x128xf32>
    %25 = tpu.matmul %24, %23, %cst {dimension_numbers = #tpu.dot_dimension_numbers<[1], [0], [0], [1], [0, 0, 1, 1], [], []>} : vector<256x40xbf16>, vector<40x128xbf16>, vector<256x128xf32> -> vector<256x128xf32>
    %26 = vector.extract_strided_slice %25 {offsets = [0, 0], sizes = [128, 128], strides = [1, 1]} : vector<256x128xf32> to vector<128x128xf32>
    %27 = vector.extract_strided_slice %25 {offsets = [128, 0], sizes = [128, 128], strides = [1, 1]} : vector<256x128xf32> to vector<128x128xf32>
    %28 = arith.addf %26, %27 : vector<128x128xf32>
    %29 = math.absf %28 : vector<128x128xf32>
    %cst_4 = arith.constant dense<0.000000e+00> : vector<128xf32>
    %30 = vector.multi_reduction <add>, %29, %cst_4 [0] : vector<128x128xf32> to vector<128xf32>
    %31 = vector.shape_cast %30 : vector<128xf32> to vector<1x128xf32>
    %c0_5 = arith.constant 0 : index
    %c0_6 = arith.constant 0 : index
    %c0_7 = arith.constant 0 : index
    %32 = vector.load %arg3[%c0_5, %c0_6, %c0_7] : memref<1x1x128xf32, #tpu.memory_space<vmem>>, vector<1x1x128xf32>
    %33 = vector.shape_cast %32 : vector<1x1x128xf32> to vector<1x128xf32>
    %34 = vector.shape_cast %31 : vector<1x128xf32> to vector<1x1x128xf32>
    tpu.vector_store %arg3[%c0_5, %c0_6, %c0_7], %34 {strides = array<i32>} : memref<1x1x128xf32, #tpu.memory_space<vmem>>, vector<1x1x128xf32>,
    return
  }
  func.func @transform_0(%arg0: i32) -> (i32, i32, i32) {
    %c0_i32 = arith.constant 0 : i32
    %c0_i32_0 = arith.constant 0 : i32
    %c0_i32_1 = arith.constant 0 : i32
    return %arg0, %c0_i32, %c0_i32_0 : i32, i32, i32
  }
  func.func @transform_1(%arg0: i32) -> (i32, i32) {
    %c0_i32 = arith.constant 0 : i32
    %c0_i32_0 = arith.constant 0 : i32
    %c0_i32_1 = arith.constant 0 : i32
    return %c0_i32, %c0_i32_0 : i32, i32
  }
  func.func @transform_2(%arg0: i32) -> (i32, i32, i32) {
    %c0_i32 = arith.constant 0 : i32
    %c0_i32_0 = arith.constant 0 : i32
    %c0_i32_1 = arith.constant 0 : i32
    return %arg0, %c0_i32, %c0_i32_0 : i32, i32, i32
  }
}

</mosaic_0001>

<llo_original>
// kernel: tpu_custom_call.1
$region0: #{tpu_custom_call.1}
  #allocation0 [shape = 'u32[]', space=smem, size = 0x4, offset = 0x4, fixed_abs, tag = 'smem constant byte address 0x4 - core index']
  #allocation1 [shape = 'u32[144,128]{1,0:T(1,128)}', space=vmem, size = 0x12000, scoped, tag = 'internal scratch']
  %s0 = inlined_call_operand.vmem [shape: s32[1,3,128], index: 0, kind: input, shape index: {}]
  %s1 = inlined_call_operand.vmem [shape: bf16[256,40], index: 1, kind: input, shape index: {}]
  %s2 = inlined_call_operand.hbm [shape: f32[1,1,128], index: 2, kind: output, shape index: {}]
  %s3 = sld [smem:[#allocation0]]
  $region18: #{tpu_custom_call.1} parent=0
    _
  %s5 = ssub.s32 1, %s3
  %s6 = scalar_select 0, %s5, %s3
  $region1: #{tpu_custom_call.1} parent=0
    #allocation2 [shape = 'u8[512]{0}', space=vmem, size = 0x400, scoped, tag = 'output window, operand 0, single buffered']
    #allocation3 [shape = 's32[1]{0}', space=sflag, size = 0x4, scoped, tag = 'scoped memory for tpu_custom_call.1']
    %7 = vsyncpa [#allocation3], 0
    // Predicated region
    $region2: #{tpu_custom_call.1} parent=1 // pred_check
      _
    $region3: #{tpu_custom_call.1} parent=1 // pred_check_branch
      %9 = sbr.rel (0) target = $region5
    $region4: #{tpu_custom_call.1} parent=1 // pred_region
      _
    $region5: #{tpu_custom_call.1} parent=1 // pred_fallthru
      _
    // Predicated region
    $region6: #{tpu_custom_call.1} parent=1 // pred_check
      _
    $region7: #{tpu_custom_call.1} parent=1 // pred_check_branch
      %11 = sbr.rel (0) target = $region9
    $region8: #{tpu_custom_call.1} parent=1 // pred_region
      _
    $region9: #{tpu_custom_call.1} parent=1 // pred_fallthru
      _
    %v13 = vld [vmem:[%s0] sm:$0x7]
    %v14 = vlaneseq
    %v15 = vshrl.u32 %v14, 7
    %v16 = vadd.s32 %v15, 8
    %v17 = vadd.s32 %v15, 16
    %v18 = vadd.s32 %v15, 24
    %v19 = vadd.s32 %v15, 32
    %v20 = vlaneseq
    %v21 = vshrl.u32 %v20, 7
    %v22 = vsub.s32 0, %v21
    %v23 = vrot.slane %v13, %v22
    %vm24 = vcmp.eq.s32.totalorder %v15, %v23
    %vm25 = vcmp.eq.s32.totalorder %v16, %v23
    %vm26 = vcmp.eq.s32.totalorder %v17, %v23
    %vm27 = vcmp.eq.s32.totalorder %v18, %v23
    %vm28 = vcmp.eq.s32.totalorder %v19, %v23
    %v29 = vsel %vm24, 1, 0
    %v30 = vsel %vm25, 1, 0
    %v31 = vsel %vm26, 1, 0
    %v32 = vsel %vm27, 1, 0
    %v33 = vsel %vm28, 1, 0
    %v34 = vcvt.s32.f32 %v29
    %v35 = vcvt.s32.f32 %v30
    %v36 = vcvt.s32.f32 %v31
    %v37 = vcvt.s32.f32 %v32
    %v38 = vcvt.s32.f32 %v33
    %v39 = vlaneseq
    %v40 = vshrl.u32 %v39, 7
    %v41 = vsub.s32 1, %v40
    %v42 = vrot.slane %v13, %v41
    %vm43 = vcmp.eq.s32.totalorder %v15, %v42
    %vm44 = vcmp.eq.s32.totalorder %v16, %v42
    %vm45 = vcmp.eq.s32.totalorder %v17, %v42
    %vm46 = vcmp.eq.s32.totalorder %v18, %v42
    %vm47 = vcmp.eq.s32.totalorder %v19, %v42
    %v48 = vsel %vm43, 1, 0
    %v49 = vsel %vm44, 1, 0
    %v50 = vsel %vm45, 1, 0
    %v51 = vsel %vm46, 1, 0
    %v52 = vsel %vm47, 1, 0
    %v53 = vcvt.s32.f32 %v48
    %v54 = vcvt.s32.f32 %v49
    %v55 = vcvt.s32.f32 %v50
    %v56 = vcvt.s32.f32 %v51
    %v57 = vcvt.s32.f32 %v52
    %v58 = vadd.f32 %v34, %v53
    %v59 = vadd.f32 %v35, %v54
    %v60 = vadd.f32 %v36, %v55
    %v61 = vadd.f32 %v37, %v56
    %v62 = vadd.f32 %v38, %v57
    %v63 = vlaneseq
    %v64 = vshrl.u32 %v63, 7
    %v65 = vsub.s32 2, %v64
    %v66 = vrot.slane %v13, %v65
    %vm67 = vcmp.eq.s32.totalorder %v15, %v66
    %vm68 = vcmp.eq.s32.totalorder %v16, %v66
    %vm69 = vcmp.eq.s32.totalorder %v17, %v66
    %vm70 = vcmp.eq.s32.totalorder %v18, %v66
    %vm71 = vcmp.eq.s32.totalorder %v19, %v66
    %v72 = vsel %vm67, 1, 0
    %v73 = vsel %vm68, 1, 0
    %v74 = vsel %vm69, 1, 0
    %v75 = vsel %vm70, 1, 0
    %v76 = vsel %vm71, 1, 0
    %v77 = vcvt.s32.f32 %v72
    %v78 = vcvt.s32.f32 %v73
    %v79 = vcvt.s32.f32 %v74
    %v80 = vcvt.s32.f32 %v75
    %v81 = vcvt.s32.f32 %v76
    %v82 = vsub.f32 %v58, %v77
    %v83 = vsub.f32 %v59, %v78
    %v84 = vsub.f32 %v60, %v79
    %v85 = vsub.f32 %v61, %v80
    %v86 = vsub.f32 %v62, %v81
    %v87 = vpack.c.bf16 %v83, %v82
    %v88 = vpack.c.bf16 %v85, %v84
    %v89 = vpack.c.bf16 %v86, %v86
    %v90 = vld [vmem:[%s1] sm:$0xf]
    %v91 = vld [vmem:[%s1 + $0x4] sm:$0xf]
    %v92 = vld [vmem:[%s1 + $0x8] sm:$0xf]
    %v93 = vld [vmem:[%s1 + $0xc] sm:$0xf]
    %v94 = vld [vmem:[%s1 + $0x10] sm:$0xf]
    %v95 = vld [vmem:[%s1 + $0x14] sm:$0xf]
    %v96 = vld [vmem:[%s1 + $0x18] sm:$0xf]
    %v97 = vld [vmem:[%s1 + $0x1c] sm:$0xf]
    %v98 = vld [vmem:[%s1 + $0x20] sm:$0xf]
    %v99 = vld [vmem:[%s1 + $0x24] sm:$0xf]
    %v100 = vld [vmem:[%s1 + $0x28] sm:$0xf]
    %v101 = vld [vmem:[%s1 + $0x2c] sm:$0xf]
    %v102 = vld [vmem:[%s1 + $0x30] sm:$0xf]
    %v103 = vld [vmem:[%s1 + $0x34] sm:$0xf]
    %v104 = vld [vmem:[%s1 + $0x38] sm:$0xf]
    %v105 = vld [vmem:[%s1 + $0x3c] sm:$0xf]
    %v106 = vld [vmem:[%s1 + $0x40] sm:$0xf]
    %v107 = vld [vmem:[%s1 + $0x44] sm:$0xf]
    %v108 = vld [vmem:[%s1 + $0x48] sm:$0xf]
    %v109 = vld [vmem:[%s1 + $0x4c] sm:$0xf]
    %v110 = vld [vmem:[%s1 + $0x50] sm:$0xf]
    %v111 = vld [vmem:[%s1 + $0x54] sm:$0xf]
    %v112 = vld [vmem:[%s1 + $0x58] sm:$0xf]
    %v113 = vld [vmem:[%s1 + $0x5c] sm:$0xf]
    %v114 = vld [vmem:[%s1 + $0x60] sm:$0xf]
    %v115 = vld [vmem:[%s1 + $0x64] sm:$0xf]
    %v116 = vld [vmem:[%s1 + $0x68] sm:$0xf]
    %v117 = vld [vmem:[%s1 + $0x6c] sm:$0xf]
    %v118 = vld [vmem:[%s1 + $0x70] sm:$0xf]
    %v119 = vld [vmem:[%s1 + $0x74] sm:$0xf]
    %v120 = vld [vmem:[%s1 + $0x78] sm:$0xf]
    %v121 = vld [vmem:[%s1 + $0x7c] sm:$0xf]
    %v154 = vunpack.c.l.b16 %v90
    %v155 = vunpack.c.l.b16 %v91
    %v156 = vunpack.c.l.b16 %v92
    %v157 = vunpack.c.l.b16 %v93
    %v158 = vunpack.c.l.b16 %v94
    %v159 = vunpack.c.l.b16 %v95
    %v160 = vunpack.c.l.b16 %v96
    %v161 = vunpack.c.l.b16 %v97
    %v162 = vunpack.c.l.b16 %v98
    %v163 = vunpack.c.l.b16 %v99
    %v164 = vunpack.c.l.b16 %v100
    %v165 = vunpack.c.l.b16 %v101
    %v166 = vunpack.c.l.b16 %v102
    %v167 = vunpack.c.l.b16 %v103
    %v168 = vunpack.c.l.b16 %v104
    %v169 = vunpack.c.l.b16 %v105
    %v170 = vunpack.c.l.b16 %v106
    %v171 = vunpack.c.l.b16 %v107
    %v172 = vunpack.c.l.b16 %v108
    %v173 = vunpack.c.l.b16 %v109
    %v174 = vunpack.c.l.b16 %v110
    %v175 = vunpack.c.l.b16 %v111
    %v176 = vunpack.c.l.b16 %v112
    %v177 = vunpack.c.l.b16 %v113
    %v178 = vunpack.c.l.b16 %v114
    %v179 = vunpack.c.l.b16 %v115
    %v180 = vunpack.c.l.b16 %v116
    %v181 = vunpack.c.l.b16 %v117
    %v182 = vunpack.c.l.b16 %v118
    %v183 = vunpack.c.l.b16 %v119
    %v184 = vunpack.c.l.b16 %v120
    %v185 = vunpack.c.l.b16 %v121
    %v186 = vpack.c.b16 %v155, %v154
    %v187 = vpack.c.b16 %v157, %v156
    %v188 = vpack.c.b16 %v159, %v158
    %v189 = vpack.c.b16 %v161, %v160
    %v190 = vpack.c.b16 %v163, %v162
    %v191 = vpack.c.b16 %v165, %v164
    %v192 = vpack.c.b16 %v167, %v166
    %v193 = vpack.c.b16 %v169, %v168
    %v194 = vpack.c.b16 %v171, %v170
    %v195 = vpack.c.b16 %v173, %v172
    %v196 = vpack.c.b16 %v175, %v174
    %v197 = vpack.c.b16 %v177, %v176
    %v198 = vpack.c.b16 %v179, %v178
    %v199 = vpack.c.b16 %v181, %v180
    %v200 = vpack.c.b16 %v183, %v182
    %v201 = vpack.c.b16 %v185, %v184
    %vm202 = vcmask 326656
    %v204 = vsel %vm202, %v186, 0
    %v207 = vsel %vm202, %v187, 0
    %v210 = vsel %vm202, %v188, 0
    %v213 = vsel %vm202, %v189, 0
    %v216 = vsel %vm202, %v190, 0
    %v219 = vsel %vm202, %v191, 0
    %v222 = vsel %vm202, %v192, 0
    %v225 = vsel %vm202, %v193, 0
    %v228 = vsel %vm202, %v194, 0
    %v231 = vsel %vm202, %v195, 0
    %v234 = vsel %vm202, %v196, 0
    %v237 = vsel %vm202, %v197, 0
    %v240 = vsel %vm202, %v198, 0
    %v243 = vsel %vm202, %v199, 0
    %v246 = vsel %vm202, %v200, 0
    %v249 = vsel %vm202, %v201, 0
    %vm251 = vcmask 1043456
    %v253 = vsel %vm251, %v89, 0
    %255 = vmatprep.subr.bf16.mxu0 0
    %256 = vmatpush1.bf16.msra.mxu0 0
    %257 = vmatprep.subr.bf16.mxu0 0
    %258 = vmatpush1.bf16.msra.mxu0 0
    %259 = vmatprep.subr.bf16.mxu0 0
    %260 = vmatpush1.bf16.msra.mxu0 0
    %261 = vmatprep.subr.bf16.mxu0 0
    %262 = vmatpush1.bf16.msra.mxu0 0
    %263 = vmatprep.subr.bf16.mxu0 0
    %264 = vmatpush1.bf16.msra.mxu0 0
    %265 = vmatprep.subr.bf16.mxu0 0
    %266 = vmatpush1.bf16.msra.mxu0 %v253
    %267 = vmatprep.subr.bf16.mxu0 0
    %268 = vmatpush1.bf16.msra.mxu0 %v88
    %269 = vmatprep.subr.bf16.mxu0 0
    %270 = vmatpush1.bf16.msra.mxu0 %v87
    %271 = vmatprep.subr.bf16.mxu0 0
    %272 = vmatpush2.bf16.msra.mxu0 0
    %273 = vmatprep.subr.bf16.mxu0 0
    %274 = vmatpush2.bf16.msra.mxu0 0
    %275 = vmatprep.subr.bf16.mxu0 0
    %276 = vmatpush2.bf16.msra.mxu0 0
    %277 = vmatprep.subr.bf16.mxu0 0
    %278 = vmatpush2.bf16.msra.mxu0 0
    %279 = vmatprep.subr.bf16.mxu0 0
    %280 = vmatpush2.bf16.msra.mxu0 0
    %281 = vmatprep.subr.bf16.mxu0 0
    %282 = vmatpush2.bf16.msra.mxu0 0
    %283 = vmatprep.subr.bf16.mxu0 0
    %284 = vmatpush2.bf16.msra.mxu0 0
    %285 = vmatprep.subr.bf16.mxu0 0
    %286 = vmatpush2.bf16.msra.mxu0 0
    %287 = vmatprep.mubr.bf16.mxu0 0
    %288 = vmatmul.mubr.bf16.gmra.mxu0 %v204
    %v289 = vpop.f32.mrf.mxu0
    %v290 = vadd.f32 0.0, %v289
    %v291 = vpop.f32.mrf.mxu0
    %v292 = vpop.f32.mrf.mxu0
    %v293 = vadd.f32 0.0, %v292
    %v294 = vpop.f32.mrf.mxu0
    %295 = vmatprep.mubr.bf16.mxu0 0
    %296 = vmatmul.mubr.bf16.gmra.mxu0 %v207
    %v297 = vpop.f32.mrf.mxu0
    %v298 = vadd.f32 0.0, %v297
    %v299 = vpop.f32.mrf.mxu0
    %v300 = vpop.f32.mrf.mxu0
    %v301 = vadd.f32 0.0, %v300
    %v302 = vpop.f32.mrf.mxu0
    %303 = vmatprep.mubr.bf16.mxu0 0
    %304 = vmatmul.mubr.bf16.gmra.mxu0 %v210
    %v305 = vpop.f32.mrf.mxu0
    %v306 = vadd.f32 0.0, %v305
    %v307 = vpop.f32.mrf.mxu0
    %v308 = vpop.f32.mrf.mxu0
    %v309 = vadd.f32 0.0, %v308
    %v310 = vpop.f32.mrf.mxu0
    %311 = vmatprep.mubr.bf16.mxu0 0
    %312 = vmatmul.mubr.bf16.gmra.mxu0 %v213
    %v313 = vpop.f32.mrf.mxu0
    %v314 = vadd.f32 0.0, %v313
    %v315 = vpop.f32.mrf.mxu0
    %v316 = vpop.f32.mrf.mxu0
    %v317 = vadd.f32 0.0, %v316
    %v318 = vpop.f32.mrf.mxu0
    %319 = vmatprep.mubr.bf16.mxu0 0
    %320 = vmatmul.mubr.bf16.gmra.mxu0 %v216
    %v321 = vpop.f32.mrf.mxu0
    %v322 = vadd.f32 0.0, %v321
    %v323 = vpop.f32.mrf.mxu0
    %v324 = vpop.f32.mrf.mxu0
    %v325 = vadd.f32 0.0, %v324
    %v326 = vpop.f32.mrf.mxu0
    %327 = vmatprep.mubr.bf16.mxu0 0
    %328 = vmatmul.mubr.bf16.gmra.mxu0 %v219
    %v329 = vpop.f32.mrf.mxu0
    %v330 = vadd.f32 0.0, %v329
    %v331 = vpop.f32.mrf.mxu0
    %v332 = vpop.f32.mrf.mxu0
    %v333 = vadd.f32 0.0, %v332
    %v334 = vpop.f32.mrf.mxu0
    %335 = vmatprep.mubr.bf16.mxu0 0
    %336 = vmatmul.mubr.bf16.gmra.mxu0 %v222
    %v337 = vpop.f32.mrf.mxu0
    %v338 = vadd.f32 0.0, %v337
    %v339 = vpop.f32.mrf.mxu0
    %v340 = vpop.f32.mrf.mxu0
    %v341 = vadd.f32 0.0, %v340
    %v342 = vpop.f32.mrf.mxu0
    %343 = vmatprep.mubr.bf16.mxu0 0
    %344 = vmatmul.mubr.bf16.gmra.mxu0 %v225
    %v345 = vpop.f32.mrf.mxu0
    %v346 = vadd.f32 0.0, %v345
    %v347 = vpop.f32.mrf.mxu0
    %v348 = vpop.f32.mrf.mxu0
    %v349 = vadd.f32 0.0, %v348
    %v350 = vpop.f32.mrf.mxu0
    %351 = vmatprep.mubr.bf16.mxu0 0
    %352 = vmatmul.mubr.bf16.gmra.mxu0 %v228
    %v353 = vpop.f32.mrf.mxu0
    %v354 = vadd.f32 0.0, %v353
    %v355 = vpop.f32.mrf.mxu0
    %v356 = vpop.f32.mrf.mxu0
    %v357 = vadd.f32 0.0, %v356
    %v358 = vpop.f32.mrf.mxu0
    %359 = vmatprep.mubr.bf16.mxu0 0
    %360 = vmatmul.mubr.bf16.gmra.mxu0 %v231
    %v361 = vpop.f32.mrf.mxu0
    %v362 = vadd.f32 0.0, %v361
    %v363 = vpop.f32.mrf.mxu0
    %v364 = vpop.f32.mrf.mxu0
    %v365 = vadd.f32 0.0, %v364
    %v366 = vpop.f32.mrf.mxu0
    %367 = vmatprep.mubr.bf16.mxu0 0
    %368 = vmatmul.mubr.bf16.gmra.mxu0 %v234
    %v369 = vpop.f32.mrf.mxu0
    %v370 = vadd.f32 0.0, %v369
    %v371 = vpop.f32.mrf.mxu0
    %v372 = vpop.f32.mrf.mxu0
    %v373 = vadd.f32 0.0, %v372
    %v374 = vpop.f32.mrf.mxu0
    %375 = vmatprep.mubr.bf16.mxu0 0
    %376 = vmatmul.mubr.bf16.gmra.mxu0 %v237
    %v377 = vpop.f32.mrf.mxu0
    %v378 = vadd.f32 0.0, %v377
    %v379 = vpop.f32.mrf.mxu0
    %v380 = vpop.f32.mrf.mxu0
    %v381 = vadd.f32 0.0, %v380
    %v382 = vpop.f32.mrf.mxu0
    %383 = vmatprep.mubr.bf16.mxu0 0
    %384 = vmatmul.mubr.bf16.gmra.mxu0 %v240
    %v385 = vpop.f32.mrf.mxu0
    %v386 = vadd.f32 0.0, %v385
    %v387 = vpop.f32.mrf.mxu0
    %v388 = vpop.f32.mrf.mxu0
    %v389 = vadd.f32 0.0, %v388
    %v390 = vpop.f32.mrf.mxu0
    %391 = vmatprep.mubr.bf16.mxu0 0
    %392 = vmatmul.mubr.bf16.gmra.mxu0 %v243
    %v393 = vpop.f32.mrf.mxu0
    %v394 = vadd.f32 0.0, %v393
    %v395 = vpop.f32.mrf.mxu0
    %v396 = vpop.f32.mrf.mxu0
    %v397 = vadd.f32 0.0, %v396
    %v398 = vpop.f32.mrf.mxu0
    %399 = vmatprep.mubr.bf16.mxu0 0
    %400 = vmatmul.mubr.bf16.gmra.mxu0 %v246
    %v401 = vpop.f32.mrf.mxu0
    %v402 = vadd.f32 0.0, %v401
    %v403 = vpop.f32.mrf.mxu0
    %v404 = vpop.f32.mrf.mxu0
    %v405 = vadd.f32 0.0, %v404
    %v406 = vpop.f32.mrf.mxu0
    %407 = vmatprep.mubr.bf16.mxu0 0
    %408 = vmatmul.mubr.bf16.gmra.mxu0 %v249
    %v409 = vpop.f32.mrf.mxu0
    %v410 = vadd.f32 0.0, %v409
    %v411 = vpop.f32.mrf.mxu0
    %v412 = vpop.f32.mrf.mxu0
    %v413 = vadd.f32 0.0, %v412
    %v414 = vpop.f32.mrf.mxu0
    %415 = vdwg.mxu0
    %v416 = vadd.f32 %v290, %v354
    %v417 = vadd.f32 %v293, %v357
    %v418 = vadd.f32 %v298, %v362
    %v419 = vadd.f32 %v301, %v365
    %v420 = vadd.f32 %v306, %v370
    %v421 = vadd.f32 %v309, %v373
    %v422 = vadd.f32 %v314, %v378
    %v423 = vadd.f32 %v317, %v381
    %v424 = vadd.f32 %v322, %v386
    %v425 = vadd.f32 %v325, %v389
    %v426 = vadd.f32 %v330, %v394
    %v427 = vadd.f32 %v333, %v397
    %v428 = vadd.f32 %v338, %v402
    %v429 = vadd.f32 %v341, %v405
    %v430 = vadd.f32 %v346, %v410
    %v431 = vadd.f32 %v349, %v413
    %v432 = vand.u32 2147483647, %v416
    %v433 = vand.u32 2147483647, %v417
    %v434 = vand.u32 2147483647, %v418
    %v435 = vand.u32 2147483647, %v419
    %v436 = vand.u32 2147483647, %v420
    %v437 = vand.u32 2147483647, %v421
    %v438 = vand.u32 2147483647, %v422
    %v439 = vand.u32 2147483647, %v423
    %v440 = vand.u32 2147483647, %v424
    %v441 = vand.u32 2147483647, %v425
    %v442 = vand.u32 2147483647, %v426
    %v443 = vand.u32 2147483647, %v427
    %v444 = vand.u32 2147483647, %v428
    %v445 = vand.u32 2147483647, %v429
    %v446 = vand.u32 2147483647, %v430
    %v447 = vand.u32 2147483647, %v431
    %v448 = vadd.f32 %v432, %v433
    %v449 = vadd.f32 %v448, %v434
    %v450 = vadd.f32 %v449, %v435
    %v451 = vadd.f32 %v450, %v436
    %v452 = vadd.f32 %v451, %v437
    %v453 = vadd.f32 %v452, %v438
    %v454 = vadd.f32 %v453, %v439
    %v455 = vadd.f32 %v454, %v440
    %v456 = vadd.f32 %v455, %v441
    %v457 = vadd.f32 %v456, %v442
    %v458 = vadd.f32 %v457, %v443
    %v459 = vadd.f32 %v458, %v444
    %v460 = vadd.f32 %v459, %v445
    %v461 = vadd.f32 %v460, %v446
    %v462 = vadd.f32 %v461, %v447
    %v463 = vrot.slane %v462, 4
    %v464 = vadd.f32 %v462, %v463
    %v465 = vrot.slane %v464, 2
    %v466 = vadd.f32 %v464, %v465
    %v467 = vrot.slane %v466, 1
    %v468 = vadd.f32 %v466, %v467
    %469 = vst [vmem:[#allocation2] sm:$0x1] %v468
    // Predicated region
    $region10: #{tpu_custom_call.1} parent=1 // pred_check
      _
    $region11: #{tpu_custom_call.1} parent=1 // pred_check_branch
      %471 = sbr.rel (0) target = $region13
    $region12: #{tpu_custom_call.1} parent=1 // pred_region
      %s473 = ssub.s32 16, 16
      %474 = vsyncadd [#allocation3], %s473
      %s476 = sshll.u32 [#allocation2], 4
      %s477 = int_to_ptr.vmem [resolvable:$true] %s476
      %479 = dma.vmem_to_hbm [thread:$0]  %s477, 16, %s2, [#allocation3]
    $region13: #{tpu_custom_call.1} parent=1 // pred_fallthru
      _
    // Predicated region
    $region14: #{tpu_custom_call.1} parent=1 // pred_check
      _
    $region15: #{tpu_custom_call.1} parent=1 // pred_check_branch
      %481 = sbr.rel (0) target = $region17
    $region16: #{tpu_custom_call.1} parent=1 // pred_region
      %482 = dma.done [#allocation3], 16
    $region17: #{tpu_custom_call.1} parent=1 // pred_fallthru
      _
    %483 = vsyncpa [#allocation3], 1

// kernel: tpu_custom_call.1
$region0: #{tpu_custom_call.1}
  #allocation0 [shape = 'u32[]', space=smem, size = 0x4, offset = 0x4, fixed_abs, tag = 'smem constant byte address 0x4 - core index']
  #allocation1 [shape = 'u32[144,128]{1,0:T(1,128)}', space=vmem, size = 0x12000, scoped, tag = 'internal scratch']
  %s0 = inlined_call_operand.vmem [shape: s32[1,3,128], index: 0, kind: input, shape index: {}]
  %s1 = inlined_call_operand.vmem [shape: bf16[256,40], index: 1, kind: input, shape index: {}]
  %s2 = inlined_call_operand.hbm [shape: f32[1,1,128], index: 2, kind: output, shape index: {}]
  %s3 = sld [smem:[#allocation0]]
  $region18: #{tpu_custom_call.1} parent=0
    _
  %s5 = ssub.s32 1, %s3
  %s6 = scalar_select 0, %s5, %s3
  $region1: #{tpu_custom_call.1} parent=0
    #allocation2 [shape = 'u8[512]{0}', space=vmem, size = 0x400, scoped, tag = 'output window, operand 0, single buffered']
    #allocation3 [shape = 's32[1]{0}', space=sflag, size = 0x4, scoped, tag = 'scoped memory for tpu_custom_call.1']
    %7 = vsyncpa [#allocation3], 0
    // Predicated region
    $region2: #{tpu_custom_call.1} parent=1 // pred_check
      _
    $region3: #{tpu_custom_call.1} parent=1 // pred_check_branch
      %9 = sbr.rel (0) target = $region5
    $region4: #{tpu_custom_call.1} parent=1 // pred_region
      _
    $region5: #{tpu_custom_call.1} parent=1 // pred_fallthru
      _
    // Predicated region
    $region6: #{tpu_custom_call.1} parent=1 // pred_check
      _
    $region7: #{tpu_custom_call.1} parent=1 // pred_check_branch
      %11 = sbr.rel (0) target = $region9
    $region8: #{tpu_custom_call.1} parent=1 // pred_region
      _
    $region9: #{tpu_custom_call.1} parent=1 // pred_fallthru
      _
    %v13 = vld [vmem:[%s0] sm:$0x7]
    %v14 = vlaneseq
    %v15 = vshrl.u32 %v14, 7
    %v16 = vadd.s32 %v15, 8
    %v17 = vadd.s32 %v15, 16
    %v18 = vadd.s32 %v15, 24
    %v19 = vadd.s32 %v15, 32
    %v20 = vlaneseq
    %v21 = vshrl.u32 %v20, 7
    %v22 = vsub.s32 0, %v21
    %v23 = vrot.slane %v13, %v22
    %vm24 = vcmp.eq.s32.totalorder %v15, %v23
    %vm25 = vcmp.eq.s32.totalorder %v16, %v23
    %vm26 = vcmp.eq.s32.totalorder %v17, %v23
    %vm27 = vcmp.eq.s32.totalorder %v18, %v23
    %vm28 = vcmp.eq.s32.totalorder %v19, %v23
    %v29 = vsel %vm24, 1, 0
    %v30 = vsel %vm25, 1, 0
    %v31 = vsel %vm26, 1, 0
    %v32 = vsel %vm27, 1, 0
    %v33 = vsel %vm28, 1, 0
    %v34 = vcvt.s32.f32 %v29
    %v35 = vcvt.s32.f32 %v30
    %v36 = vcvt.s32.f32 %v31
    %v37 = vcvt.s32.f32 %v32
    %v38 = vcvt.s32.f32 %v33
    %v39 = vlaneseq
    %v40 = vshrl.u32 %v39, 7
    %v41 = vsub.s32 1, %v40
    %v42 = vrot.slane %v13, %v41
    %vm43 = vcmp.eq.s32.totalorder %v15, %v42
    %vm44 = vcmp.eq.s32.totalorder %v16, %v42
    %vm45 = vcmp.eq.s32.totalorder %v17, %v42
    %vm46 = vcmp.eq.s32.totalorder %v18, %v42
    %vm47 = vcmp.eq.s32.totalorder %v19, %v42
    %v48 = vsel %vm43, 1, 0
    %v49 = vsel %vm44, 1, 0
    %v50 = vsel %vm45, 1, 0
    %v51 = vsel %vm46, 1, 0
    %v52 = vsel %vm47, 1, 0
    %v53 = vcvt.s32.f32 %v48
    %v54 = vcvt.s32.f32 %v49
    %v55 = vcvt.s32.f32 %v50
    %v56 = vcvt.s32.f32 %v51
    %v57 = vcvt.s32.f32 %v52
    %v58 = vadd.f32 %v34, %v53
    %v59 = vadd.f32 %v35, %v54
    %v60 = vadd.f32 %v36, %v55
    %v61 = vadd.f32 %v37, %v56
    %v62 = vadd.f32 %v38, %v57
    %v63 = vlaneseq
    %v64 = vshrl.u32 %v63, 7
    %v65 = vsub.s32 2, %v64
    %v66 = vrot.slane %v13, %v65
    %vm67 = vcmp.eq.s32.totalorder %v15, %v66
    %vm68 = vcmp.eq.s32.totalorder %v16, %v66
    %vm69 = vcmp.eq.s32.totalorder %v17, %v66
    %vm70 = vcmp.eq.s32.totalorder %v18, %v66
    %vm71 = vcmp.eq.s32.totalorder %v19, %v66
    %v72 = vsel %vm67, 1, 0
    %v73 = vsel %vm68, 1, 0
    %v74 = vsel %vm69, 1, 0
    %v75 = vsel %vm70, 1, 0
    %v76 = vsel %vm71, 1, 0
    %v77 = vcvt.s32.f32 %v72
    %v78 = vcvt.s32.f32 %v73
    %v79 = vcvt.s32.f32 %v74
    %v80 = vcvt.s32.f32 %v75
    %v81 = vcvt.s32.f32 %v76
    %v82 = vsub.f32 %v58, %v77
    %v83 = vsub.f32 %v59, %v78
    %v84 = vsub.f32 %v60, %v79
    %v85 = vsub.f32 %v61, %v80
    %v86 = vsub.f32 %v62, %v81
    %v87 = vpack.c.bf16 %v83, %v82
    %v88 = vpack.c.bf16 %v85, %v84
    %v89 = vpack.c.bf16 %v86, %v86
    %v90 = vld [vmem:[%s1] sm:$0xf]
    %v91 = vld [vmem:[%s1 + $0x4] sm:$0xf]
    %v92 = vld [vmem:[%s1 + $0x8] sm:$0xf]
    %v93 = vld [vmem:[%s1 + $0xc] sm:$0xf]
    %v94 = vld [vmem:[%s1 + $0x10] sm:$0xf]
    %v95 = vld [vmem:[%s1 + $0x14] sm:$0xf]
    %v96 = vld [vmem:[%s1 + $0x18] sm:$0xf]
    %v97 = vld [vmem:[%s1 + $0x1c] sm:$0xf]
    %v98 = vld [vmem:[%s1 + $0x20] sm:$0xf]
    %v99 = vld [vmem:[%s1 + $0x24] sm:$0xf]
    %v100 = vld [vmem:[%s1 + $0x28] sm:$0xf]
    %v101 = vld [vmem:[%s1 + $0x2c] sm:$0xf]
    %v102 = vld [vmem:[%s1 + $0x30] sm:$0xf]
    %v103 = vld [vmem:[%s1 + $0x34] sm:$0xf]
    %v104 = vld [vmem:[%s1 + $0x38] sm:$0xf]
    %v105 = vld [vmem:[%s1 + $0x3c] sm:$0xf]
    %v106 = vld [vmem:[%s1 + $0x40] sm:$0xf]
    %v107 = vld [vmem:[%s1 + $0x44] sm:$0xf]
    %v108 = vld [vmem:[%s1 + $0x48] sm:$0xf]
    %v109 = vld [vmem:[%s1 + $0x4c] sm:$0xf]
    %v110 = vld [vmem:[%s1 + $0x50] sm:$0xf]
    %v111 = vld [vmem:[%s1 + $0x54] sm:$0xf]
    %v112 = vld [vmem:[%s1 + $0x58] sm:$0xf]
    %v113 = vld [vmem:[%s1 + $0x5c] sm:$0xf]
    %v114 = vld [vmem:[%s1 + $0x60] sm:$0xf]
    %v115 = vld [vmem:[%s1 + $0x64] sm:$0xf]
    %v116 = vld [vmem:[%s1 + $0x68] sm:$0xf]
    %v117 = vld [vmem:[%s1 + $0x6c] sm:$0xf]
    %v118 = vld [vmem:[%s1 + $0x70] sm:$0xf]
    %v119 = vld [vmem:[%s1 + $0x74] sm:$0xf]
    %v120 = vld [vmem:[%s1 + $0x78] sm:$0xf]
    %v121 = vld [vmem:[%s1 + $0x7c] sm:$0xf]
    %v154 = vunpack.c.l.b16 %v90
    %v155 = vunpack.c.l.b16 %v91
    %v156 = vunpack.c.l.b16 %v92
    %v157 = vunpack.c.l.b16 %v93
    %v158 = vunpack.c.l.b16 %v94
    %v159 = vunpack.c.l.b16 %v95
    %v160 = vunpack.c.l.b16 %v96
    %v161 = vunpack.c.l.b16 %v97
    %v162 = vunpack.c.l.b16 %v98
    %v163 = vunpack.c.l.b16 %v99
    %v164 = vunpack.c.l.b16 %v100
    %v165 = vunpack.c.l.b16 %v101
    %v166 = vunpack.c.l.b16 %v102
    %v167 = vunpack.c.l.b16 %v103
    %v168 = vunpack.c.l.b16 %v104
    %v169 = vunpack.c.l.b16 %v105
    %v170 = vunpack.c.l.b16 %v106
    %v171 = vunpack.c.l.b16 %v107
    %v172 = vunpack.c.l.b16 %v108
    %v173 = vunpack.c.l.b16 %v109
    %v174 = vunpack.c.l.b16 %v110
    %v175 = vunpack.c.l.b16 %v111
    %v176 = vunpack.c.l.b16 %v112
    %v177 = vunpack.c.l.b16 %v113
    %v178 = vunpack.c.l.b16 %v114
    %v179 = vunpack.c.l.b16 %v115
    %v180 = vunpack.c.l.b16 %v116
    %v181 = vunpack.c.l.b16 %v117
    %v182 = vunpack.c.l.b16 %v118
    %v183 = vunpack.c.l.b16 %v119
    %v184 = vunpack.c.l.b16 %v120
    %v185 = vunpack.c.l.b16 %v121
    %v186 = vpack.c.b16 %v155, %v154
    %v187 = vpack.c.b16 %v157, %v156
    %v188 = vpack.c.b16 %v159, %v158
    %v189 = vpack.c.b16 %v161, %v160
    %v190 = vpack.c.b16 %v163, %v162
    %v191 = vpack.c.b16 %v165, %v164
    %v192 = vpack.c.b16 %v167, %v166
    %v193 = vpack.c.b16 %v169, %v168
    %v194 = vpack.c.b16 %v171, %v170
    %v195 = vpack.c.b16 %v173, %v172
    %v196 = vpack.c.b16 %v175, %v174
    %v197 = vpack.c.b16 %v177, %v176
    %v198 = vpack.c.b16 %v179, %v178
    %v199 = vpack.c.b16 %v181, %v180
    %v200 = vpack.c.b16 %v183, %v182
    %v201 = vpack.c.b16 %v185, %v184
    %vm202 = vcmask 326656
    %v204 = vsel %vm202, %v186, 0
    %v207 = vsel %vm202, %v187, 0
    %v210 = vsel %vm202, %v188, 0
    %v213 = vsel %vm202, %v189, 0
    %v216 = vsel %vm202, %v190, 0
    %v219 = vsel %vm202, %v191, 0
    %v222 = vsel %vm202, %v192, 0
    %v225 = vsel %vm202, %v193, 0
    %v228 = vsel %vm202, %v194, 0
    %v231 = vsel %vm202, %v195, 0
    %v234 = vsel %vm202, %v196, 0
    %v237 = vsel %vm202, %v197, 0
    %v240 = vsel %vm202, %v198, 0
    %v243 = vsel %vm202, %v199, 0
    %v246 = vsel %vm202, %v200, 0
    %v249 = vsel %vm202, %v201, 0
    %vm251 = vcmask 1043456
    %v253 = vsel %vm251, %v89, 0
    %255 = vmatprep.subr.bf16.mxu0 0
    %256 = vmatpush1.bf16.msra.mxu0 0
    %257 = vmatprep.subr.bf16.mxu0 0
    %258 = vmatpush1.bf16.msra.mxu0 0
    %259 = vmatprep.subr.bf16.mxu0 0
    %260 = vmatpush1.bf16.msra.mxu0 0
    %261 = vmatprep.subr.bf16.mxu0 0
    %262 = vmatpush1.bf16.msra.mxu0 0
    %263 = vmatprep.subr.bf16.mxu0 0
    %264 = vmatpush1.bf16.msra.mxu0 0
    %265 = vmatprep.subr.bf16.mxu0 0
    %266 = vmatpush1.bf16.msra.mxu0 %v253
    %267 = vmatprep.subr.bf16.mxu0 0
    %268 = vmatpush1.bf16.msra.mxu0 %v88
    %269 = vmatprep.subr.bf16.mxu0 0
    %270 = vmatpush1.bf16.msra.mxu0 %v87
    %271 = vmatprep.subr.bf16.mxu0 0
    %272 = vmatpush2.bf16.msra.mxu0 0
    %273 = vmatprep.subr.bf16.mxu0 0
    %274 = vmatpush2.bf16.msra.mxu0 0
    %275 = vmatprep.subr.bf16.mxu0 0
    %276 = vmatpush2.bf16.msra.mxu0 0
    %277 = vmatprep.subr.bf16.mxu0 0
    %278 = vmatpush2.bf16.msra.mxu0 0
    %279 = vmatprep.subr.bf16.mxu0 0
    %280 = vmatpush2.bf16.msra.mxu0 0
    %281 = vmatprep.subr.bf16.mxu0 0
    %282 = vmatpush2.bf16.msra.mxu0 0
    %283 = vmatprep.subr.bf16.mxu0 0
    %284 = vmatpush2.bf16.msra.mxu0 0
    %285 = vmatprep.subr.bf16.mxu0 0
    %286 = vmatpush2.bf16.msra.mxu0 0
    %287 = vmatprep.mubr.bf16.mxu0 0
    %288 = vmatmul.mubr.bf16.gmra.mxu0 %v204
    %v289 = vpop.f32.mrf.mxu0
    %v290 = vadd.f32 0.0, %v289
    %v291 = vpop.f32.mrf.mxu0
    %v292 = vpop.f32.mrf.mxu0
    %v293 = vadd.f32 0.0, %v292
    %v294 = vpop.f32.mrf.mxu0
    %295 = vmatprep.mubr.bf16.mxu0 0
    %296 = vmatmul.mubr.bf16.gmra.mxu0 %v207
    %v297 = vpop.f32.mrf.mxu0
    %v298 = vadd.f32 0.0, %v297
    %v299 = vpop.f32.mrf.mxu0
    %v300 = vpop.f32.mrf.mxu0
    %v301 = vadd.f32 0.0, %v300
    %v302 = vpop.f32.mrf.mxu0
    %303 = vmatprep.mubr.bf16.mxu0 0
    %304 = vmatmul.mubr.bf16.gmra.mxu0 %v210
    %v305 = vpop.f32.mrf.mxu0
    %v306 = vadd.f32 0.0, %v305
    %v307 = vpop.f32.mrf.mxu0
    %v308 = vpop.f32.mrf.mxu0
    %v309 = vadd.f32 0.0, %v308
    %v310 = vpop.f32.mrf.mxu0
    %311 = vmatprep.mubr.bf16.mxu0 0
    %312 = vmatmul.mubr.bf16.gmra.mxu0 %v213
    %v313 = vpop.f32.mrf.mxu0
    %v314 = vadd.f32 0.0, %v313
    %v315 = vpop.f32.mrf.mxu0
    %v316 = vpop.f32.mrf.mxu0
    %v317 = vadd.f32 0.0, %v316
    %v318 = vpop.f32.mrf.mxu0
    %319 = vmatprep.mubr.bf16.mxu0 0
    %320 = vmatmul.mubr.bf16.gmra.mxu0 %v216
    %v321 = vpop.f32.mrf.mxu0
    %v322 = vadd.f32 0.0, %v321
    %v323 = vpop.f32.mrf.mxu0
    %v324 = vpop.f32.mrf.mxu0
    %v325 = vadd.f32 0.0, %v324
    %v326 = vpop.f32.mrf.mxu0
    %327 = vmatprep.mubr.bf16.mxu0 0
    %328 = vmatmul.mubr.bf16.gmra.mxu0 %v219
    %v329 = vpop.f32.mrf.mxu0
    %v330 = vadd.f32 0.0, %v329
    %v331 = vpop.f32.mrf.mxu0
    %v332 = vpop.f32.mrf.mxu0
    %v333 = vadd.f32 0.0, %v332
    %v334 = vpop.f32.mrf.mxu0
    %335 = vmatprep.mubr.bf16.mxu0 0
    %336 = vmatmul.mubr.bf16.gmra.mxu0 %v222
    %v337 = vpop.f32.mrf.mxu0
    %v338 = vadd.f32 0.0, %v337
    %v339 = vpop.f32.mrf.mxu0
    %v340 = vpop.f32.mrf.mxu0
    %v341 = vadd.f32 0.0, %v340
    %v342 = vpop.f32.mrf.mxu0
    %343 = vmatprep.mubr.bf16.mxu0 0
    %344 = vmatmul.mubr.bf16.gmra.mxu0 %v225
    %v345 = vpop.f32.mrf.mxu0
    %v346 = vadd.f32 0.0, %v345
    %v347 = vpop.f32.mrf.mxu0
    %v348 = vpop.f32.mrf.mxu0
    %v349 = vadd.f32 0.0, %v348
    %v350 = vpop.f32.mrf.mxu0
    %351 = vmatprep.mubr.bf16.mxu0 0
    %352 = vmatmul.mubr.bf16.gmra.mxu0 %v228
    %v353 = vpop.f32.mrf.mxu0
    %v354 = vadd.f32 0.0, %v353
    %v355 = vpop.f32.mrf.mxu0
    %v356 = vpop.f32.mrf.mxu0
    %v357 = vadd.f32 0.0, %v356
    %v358 = vpop.f32.mrf.mxu0
    %359 = vmatprep.mubr.bf16.mxu0 0
    %360 = vmatmul.mubr.bf16.gmra.mxu0 %v231
    %v361 = vpop.f32.mrf.mxu0
    %v362 = vadd.f32 0.0, %v361
    %v363 = vpop.f32.mrf.mxu0
    %v364 = vpop.f32.mrf.mxu0
    %v365 = vadd.f32 0.0, %v364
    %v366 = vpop.f32.mrf.mxu0
    %367 = vmatprep.mubr.bf16.mxu0 0
    %368 = vmatmul.mubr.bf16.gmra.mxu0 %v234
    %v369 = vpop.f32.mrf.mxu0
    %v370 = vadd.f32 0.0, %v369
    %v371 = vpop.f32.mrf.mxu0
    %v372 = vpop.f32.mrf.mxu0
    %v373 = vadd.f32 0.0, %v372
    %v374 = vpop.f32.mrf.mxu0
    %375 = vmatprep.mubr.bf16.mxu0 0
    %376 = vmatmul.mubr.bf16.gmra.mxu0 %v237
    %v377 = vpop.f32.mrf.mxu0
    %v378 = vadd.f32 0.0, %v377
    %v379 = vpop.f32.mrf.mxu0
    %v380 = vpop.f32.mrf.mxu0
    %v381 = vadd.f32 0.0, %v380
    %v382 = vpop.f32.mrf.mxu0
    %383 = vmatprep.mubr.bf16.mxu0 0
    %384 = vmatmul.mubr.bf16.gmra.mxu0 %v240
    %v385 = vpop.f32.mrf.mxu0
    %v386 = vadd.f32 0.0, %v385
    %v387 = vpop.f32.mrf.mxu0
    %v388 = vpop.f32.mrf.mxu0
    %v389 = vadd.f32 0.0, %v388
    %v390 = vpop.f32.mrf.mxu0
    %391 = vmatprep.mubr.bf16.mxu0 0
    %392 = vmatmul.mubr.bf16.gmra.mxu0 %v243
    %v393 = vpop.f32.mrf.mxu0
    %v394 = vadd.f32 0.0, %v393
    %v395 = vpop.f32.mrf.mxu0
    %v396 = vpop.f32.mrf.mxu0
    %v397 = vadd.f32 0.0, %v396
    %v398 = vpop.f32.mrf.mxu0
    %399 = vmatprep.mubr.bf16.mxu0 0
    %400 = vmatmul.mubr.bf16.gmra.mxu0 %v246
    %v401 = vpop.f32.mrf.mxu0
    %v402 = vadd.f32 0.0, %v401
    %v403 = vpop.f32.mrf.mxu0
    %v404 = vpop.f32.mrf.mxu0
    %v405 = vadd.f32 0.0, %v404
    %v406 = vpop.f32.mrf.mxu0
    %407 = vmatprep.mubr.bf16.mxu0 0
    %408 = vmatmul.mubr.bf16.gmra.mxu0 %v249
    %v409 = vpop.f32.mrf.mxu0
    %v410 = vadd.f32 0.0, %v409
    %v411 = vpop.f32.mrf.mxu0
    %v412 = vpop.f32.mrf.mxu0
    %v413 = vadd.f32 0.0, %v412
    %v414 = vpop.f32.mrf.mxu0
    %415 = vdwg.mxu0
    %v416 = vadd.f32 %v290, %v354
    %v417 = vadd.f32 %v293, %v357
    %v418 = vadd.f32 %v298, %v362
    %v419 = vadd.f32 %v301, %v365
    %v420 = vadd.f32 %v306, %v370
    %v421 = vadd.f32 %v309, %v373
    %v422 = vadd.f32 %v314, %v378
    %v423 = vadd.f32 %v317, %v381
    %v424 = vadd.f32 %v322, %v386
    %v425 = vadd.f32 %v325, %v389
    %v426 = vadd.f32 %v330, %v394
    %v427 = vadd.f32 %v333, %v397
    %v428 = vadd.f32 %v338, %v402
    %v429 = vadd.f32 %v341, %v405
    %v430 = vadd.f32 %v346, %v410
    %v431 = vadd.f32 %v349, %v413
    %v432 = vand.u32 2147483647, %v416
    %v433 = vand.u32 2147483647, %v417
    %v434 = vand.u32 2147483647, %v418
    %v435 = vand.u32 2147483647, %v419
    %v436 = vand.u32 2147483647, %v420
    %v437 = vand.u32 2147483647, %v421
    %v438 = vand.u32 2147483647, %v422
    %v439 = vand.u32 2147483647, %v423
    %v440 = vand.u32 2147483647, %v424
    %v441 = vand.u32 2147483647, %v425
    %v442 = vand.u32 2147483647, %v426
    %v443 = vand.u32 2147483647, %v427
    %v444 = vand.u32 2147483647, %v428
    %v445 = vand.u32 2147483647, %v429
    %v446 = vand.u32 2147483647, %v430
    %v447 = vand.u32 2147483647, %v431
    %v448 = vadd.f32 %v432, %v433
    %v449 = vadd.f32 %v448, %v434
    %v450 = vadd.f32 %v449, %v435
    %v451 = vadd.f32 %v450, %v436
    %v452 = vadd.f32 %v451, %v437
    %v453 = vadd.f32 %v452, %v438
    %v454 = vadd.f32 %v453, %v439
    %v455 = vadd.f32 %v454, %v440
    %v456 = vadd.f32 %v455, %v441
    %v457 = vadd.f32 %v456, %v442
    %v458 = vadd.f32 %v457, %v443
    %v459 = vadd.f32 %v458, %v444
    %v460 = vadd.f32 %v459, %v445
    %v461 = vadd.f32 %v460, %v446
    %v462 = vadd.f32 %v461, %v447
    %v463 = vrot.slane %v462, 4
    %v464 = vadd.f32 %v462, %v463
    %v465 = vrot.slane %v464, 2
    %v466 = vadd.f32 %v464, %v465
    %v467 = vrot.slane %v466, 1
    %v468 = vadd.f32 %v466, %v467
    %469 = vst [vmem:[#allocation2] sm:$0x1] %v468
    // Predicated region
    $region10: #{tpu_custom_call.1} parent=1 // pred_check
      _
    $region11: #{tpu_custom_call.1} parent=1 // pred_check_branch
      %471 = sbr.rel (0) target = $region13
    $region12: #{tpu_custom_call.1} parent=1 // pred_region
      %s473 = ssub.s32 16, 16
      %474 = vsyncadd [#allocation3], %s473
      %s476 = sshll.u32 [#allocation2], 4
      %s477 = int_to_ptr.vmem [resolvable:$true] %s476
      %479 = dma.vmem_to_hbm [thread:$0]  %s477, 16, %s2, [#allocation3]
    $region13: #{tpu_custom_call.1} parent=1 // pred_fallthru
      _
    // Predicated region
    $region14: #{tpu_custom_call.1} parent=1 // pred_check
      _
    $region15: #{tpu_custom_call.1} parent=1 // pred_check_branch
      %481 = sbr.rel (0) target = $region17
    $region16: #{tpu_custom_call.1} parent=1 // pred_region
      %482 = dma.done [#allocation3], 16
    $region17: #{tpu_custom_call.1} parent=1 // pred_fallthru
      _
    %483 = vsyncpa [#allocation3], 1

</llo_original>
